<compile_context>
chip_gen: v5e
topology: v5e:2x2
jax: 0.10.0
libtpu: 0.0.40
codegen_flags: <defaults>
</compile_context>

<pallas_src>
import functools

import jax
import jax.numpy as jnp
from jax.experimental import pallas as pl
from jax.experimental.pallas import tpu as pltpu


def _round_up(x, m):
    return ((x + m - 1) // m) * m


def _actor_critic_kernel(
    x_ref, act_ref,
    w1_ref, b1_ref, w2_ref, b2_ref, w3_ref, b3_ref,
    out_ref,
    *, action_dim,
):
    """Fused actor+critic heads, batch on the lane axis.

    x_ref  : [D, TB]       f32 state (transposed -> batch on lanes)
    act_ref: [1, TB]       i32 actions (lane-dense)
    w1_ref : [2*L1, D]     fused layer-1 weights (actor rows, then critic rows)
    w2_ref : [2*L2, 2*L1]  block-diagonal fused layer-2 weights
    w3_ref : [A+1, 2*L2]   block-diagonal fused layer-3 weights (A actor + 1 critic)
    b*_ref : [rows, 1]     fused biases (broadcast over lanes)
    out_ref: [A+3, TB]     rows 0..A-1 = probs, A = logp, A+1 = value, A+2 = entropy
    """
    x = x_ref[...]

    # 3 fused matmuls (actor + critic together) instead of 6.
    h1 = jnp.tanh(
        jnp.dot(w1_ref[...], x, preferred_element_type=jnp.float32) + b1_ref[...]
    )
    h2 = jnp.tanh(
        jnp.dot(w2_ref[...], h1, preferred_element_type=jnp.float32) + b2_ref[...]
    )
    z = jnp.dot(w3_ref[...], h2, preferred_element_type=jnp.float32) + b3_ref[...]

    logits = z[:action_dim, :]                  # [A, TB]  (actor logits)
    value = z[action_dim:action_dim + 1, :]     # [1, TB]  (critic value)

    # Stable softmax over the action (sublane) axis.
    m = jnp.max(logits, axis=0, keepdims=True)  # [1, TB]
    shifted = logits - m
    e = jnp.exp(shifted)
    denom = jnp.sum(e, axis=0, keepdims=True)
    probs = e * pl.reciprocal(denom, approx=False)

    # Analytic log-probs: log p = shifted - log(denom)  (one log per column).
    log_denom = jnp.log(denom)
    log_probs = shifted - log_denom

    # entropy = -sum p log p = log_denom - sum(p * shifted)
    entropy = log_denom - jnp.sum(probs * shifted, axis=0, keepdims=True)

    # log_prob(action): one-hot over the sublane (action) axis.
    action = act_ref[...]                       # [1, TB] i32
    row = jax.lax.broadcasted_iota(jnp.int32, logits.shape, 0)
    onehot = (row == action).astype(jnp.float32)
    logp = jnp.sum(onehot * log_probs, axis=0, keepdims=True)

    out_ref[0:action_dim, :] = probs
    out_ref[action_dim:action_dim + 1, :] = logp
    out_ref[action_dim + 1:action_dim + 2, :] = value
    out_ref[action_dim + 2:action_dim + 3, :] = entropy


def _pack_params(p):
    """Fuse actor/critic weight stacks: layer-1 concat, layers 2/3 block-diagonal.

    Input params are stored as [in, out] / [1, out]; packed weights are [out, in]
    (so the kernel does W @ x with batch on lanes) and biases are [out, 1].
    """
    A = p["aw3"].shape[1]
    l1 = p["aw1"].shape[1]
    l2 = p["aw2"].shape[1]
    f32 = jnp.float32

    W1 = jnp.concatenate([p["aw1"].T, p["cw1"].T], axis=0).astype(f32)   # [2*l1, D]
    b1 = jnp.concatenate([p["ab1"].T, p["cb1"].T], axis=0).astype(f32)   # [2*l1, 1]

    W2 = jnp.zeros((2 * l2, 2 * l1), f32)
    W2 = W2.at[:l2, :l1].set(p["aw2"].T).at[l2:, l1:].set(p["cw2"].T)    # [2*l2, 2*l1]
    b2 = jnp.concatenate([p["ab2"].T, p["cb2"].T], axis=0).astype(f32)   # [2*l2, 1]

    W3 = jnp.zeros((A + 1, 2 * l2), f32)
    W3 = W3.at[:A, :l2].set(p["aw3"].T).at[A:, l2:].set(p["cw3"].T)      # [A+1, 2*l2]
    b3 = jnp.concatenate([p["ab3"].T, p["cb3"].T], axis=0).astype(f32)   # [A+1, 1]

    return W1, b1, W2, b2, W3, b3, A


def actor_critic_evaluate(state, action, params, *, tile_b=512):
    """Pallas-fused ActorCritic.evaluate (minus sampling).

    Args:
      state:  [B, input_dim] float32
      action: [B] int32
      params: dict of actor/critic weights (see init_params).

    Returns:
      (action_logprobs [B], state_values [B, 1], dist_entropy [B], action_probs [B, A])
    """
    B, D = state.shape
    W1, b1, W2, b2, W3, b3, A = _pack_params(params)
    n_out = A + 3

    # Batch goes on the lane axis; pad to a multiple of the lane tile.
    TB = min(tile_b, _round_up(B, 128))
    B_pad = _round_up(B, TB)

    x_t = jnp.zeros((D, B_pad), jnp.float32).at[:, :B].set(
        state.astype(jnp.float32).T
    )
    act_row = jnp.zeros((1, B_pad), jnp.int32).at[:, :B].set(
        action.astype(jnp.int32)[None, :]
    )

    const = lambda i: (0, 0)   # weights/biases: same block every step -> VMEM-resident

    out = pl.pallas_call(
        functools.partial(_actor_critic_kernel, action_dim=A),
        out_shape=jax.ShapeDtypeStruct((n_out, B_pad), jnp.float32),
        grid=(B_pad // TB,),
        in_specs=[
            pl.BlockSpec((D, TB), lambda i: (0, i)),   # state tile (batch on lanes)
            pl.BlockSpec((1, TB), lambda i: (0, i)),   # actions tile
            pl.BlockSpec(W1.shape, const),
            pl.BlockSpec(b1.shape, const),
            pl.BlockSpec(W2.shape, const),
            pl.BlockSpec(b2.shape, const),
            pl.BlockSpec(W3.shape, const),
            pl.BlockSpec(b3.shape, const),
        ],
        out_specs=pl.BlockSpec((n_out, TB), lambda i: (0, i)),
        compiler_params=pltpu.CompilerParams(
            dimension_semantics=("parallel",),   # megacore-shard batch tiles (v7x)
        ),
    )(x_t, act_row, W1, b1, W2, b2, W3, b3)

    probs = out[:A, :B].T            # [B, A]
    logp = out[A, :B]                # [B]
    value = out[A + 1, :B][:, None]  # [B, 1]
    ent = out[A + 2, :B]             # [B]
    return logp, value, ent, probs


def init_params(key, state_dim, action_dim, latent_dim):
    """Deterministic init mimicking nn.Linear default (uniform +/- 1/sqrt(fan_in)).

    Weights are stored as [in_features, out_features] (pre-transposed vs PyTorch),
    biases as [1, out_features].
    """
    input_dim = state_dim + latent_dim
    l1, l2 = 16, 8

    def linear(key, fan_in, fan_out):
        kw, kb = jax.random.split(key)
        bound = 1.0 / jnp.sqrt(float(fan_in))
        w = jax.random.uniform(kw, (fan_in, fan_out), jnp.float32, -bound, bound)
        b = jax.random.uniform(kb, (1, fan_out), jnp.float32, -bound, bound)
        return w, b

    keys = jax.random.split(key, 6)
    aw1, ab1 = linear(keys[0], input_dim, l1)
    aw2, ab2 = linear(keys[1], l1, l2)
    aw3, ab3 = linear(keys[2], l2, action_dim)
    cw1, cb1 = linear(keys[3], input_dim, l1)
    cw2, cb2 = linear(keys[4], l1, l2)
    cw3, cb3 = linear(keys[5], l2, 1)
    return dict(
        aw1=aw1, ab1=ab1, aw2=aw2, ab2=ab2, aw3=aw3, ab3=ab3,
        cw1=cw1, cb1=cb1, cw2=cw2, cb2=cb2, cw3=cw3, cb3=cb3,
    )


def _reference_evaluate(state, action, p):
    """Pure-JAX reference for correctness checking."""
    h = jnp.tanh(state @ p["aw1"] + p["ab1"])
    h = jnp.tanh(h @ p["aw2"] + p["ab2"])
    logits = h @ p["aw3"] + p["ab3"]
    probs = jax.nn.softmax(logits, axis=-1)
    logp_all = jnp.log(probs)
    logp = jnp.take_along_axis(logp_all, action[:, None], axis=-1)[:, 0]
    ent = -jnp.sum(probs * logp_all, axis=-1)
    hc = jnp.tanh(state @ p["cw1"] + p["cb1"])
    hc = jnp.tanh(hc @ p["cw2"] + p["cb2"])
    value = hc @ p["cw3"] + p["cb3"]
    return logp, value, ent, probs


if __name__ == "__main__":
    state_dim, action_dim, latent_dim = 8, 4, 4
    batch = 8

    key = jax.random.PRNGKey(0)
    k_params, k_state, k_action = jax.random.split(key, 3)

    params = init_params(k_params, state_dim, action_dim, latent_dim)
    state = jax.random.normal(k_state, (batch, state_dim + latent_dim), jnp.float32)
    action = jax.random.randint(k_action, (batch,), 0, action_dim, jnp.int32)

    logp, value, ent, probs = actor_critic_evaluate(state, action, params)
    jax.block_until_ready((logp, value, ent, probs))

    # sanity check against pure-JAX reference
    r_logp, r_value, r_ent, r_probs = _reference_evaluate(state, action, params)
    assert jnp.allclose(probs, r_probs, atol=1e-5), "probs mismatch"
    assert jnp.allclose(value, r_value, atol=1e-5), "value mismatch"
    assert jnp.allclose(logp, r_logp, atol=1e-5), "logprob mismatch"
    assert jnp.allclose(ent, r_ent, atol=1e-5), "entropy mismatch"

    print("KERNEL_OK")
</pallas_src>

<mosaic_0001>
module attributes {stable_mosaic.version = 11 : i64} {
  func.func @_actor_critic_kernel(%arg0: i32, %arg1: memref<12x128xf32, #tpu.memory_space<vmem>>, %arg2: memref<1x128xi32, #tpu.memory_space<vmem>>, %arg3: memref<32x12xf32, #tpu.memory_space<vmem>>, %arg4: memref<32x1xf32, #tpu.memory_space<vmem>>, %arg5: memref<16x32xf32, #tpu.memory_space<vmem>>, %arg6: memref<16x1xf32, #tpu.memory_space<vmem>>, %arg7: memref<5x16xf32, #tpu.memory_space<vmem>>, %arg8: memref<5x1xf32, #tpu.memory_space<vmem>>, %arg9: memref<7x128xf32, #tpu.memory_space<vmem>>) attributes {dimension_semantics = [#tpu.dimension_semantics<parallel>], iteration_bounds = array<i64: 1>, scalar_prefetch = 0 : i64, scratch_operands = 0 : i64, tpu.core_type = #tpu.core_type<tc>, window_params = [{transform_indices = @transform_0, window_bounds = array<i64: 12, 128>}, {transform_indices = @transform_1, window_bounds = array<i64: 1, 128>}, {pipeline_mode = #tpu.pipeline_mode<synchronous>, transform_indices = @transform_2, window_bounds = array<i64: 32, 12>}, {pipeline_mode = #tpu.pipeline_mode<synchronous>, transform_indices = @transform_3, window_bounds = array<i64: 32, 1>}, {pipeline_mode = #tpu.pipeline_mode<synchronous>, transform_indices = @transform_4, window_bounds = array<i64: 16, 32>}, {pipeline_mode = #tpu.pipeline_mode<synchronous>, transform_indices = @transform_5, window_bounds = array<i64: 16, 1>}, {pipeline_mode = #tpu.pipeline_mode<synchronous>, transform_indices = @transform_6, window_bounds = array<i64: 5, 16>}, {pipeline_mode = #tpu.pipeline_mode<synchronous>, transform_indices = @transform_7, window_bounds = array<i64: 5, 1>}, {transform_indices = @transform_8, window_bounds = array<i64: 7, 128>}]} {
    %c0 = arith.constant 0 : index
    %c0_0 = arith.constant 0 : index
    %0 = vector.load %arg1[%c0, %c0_0] : memref<12x128xf32, #tpu.memory_space<vmem>>, vector<12x128xf32>
    %c0_1 = arith.constant 0 : index
    %c0_2 = arith.constant 0 : index
    %1 = vector.load %arg3[%c0_1, %c0_2] : memref<32x12xf32, #tpu.memory_space<vmem>>, vector<32x12xf32>
    %cst = arith.constant dense<0.000000e+00> : vector<32x128xf32>
    %2 = tpu.matmul %1, %0, %cst {dimension_numbers = #tpu.dot_dimension_numbers<[1], [0], [0], [1], [0, 0, 1, 1], [], []>} : vector<32x12xf32>, vector<12x128xf32>, vector<32x128xf32> -> vector<32x128xf32>
    %c0_3 = arith.constant 0 : index
    %c0_4 = arith.constant 0 : index
    %3 = vector.load %arg4[%c0_3, %c0_4] : memref<32x1xf32, #tpu.memory_space<vmem>>, vector<32x1xf32>
    %4 = vector.broadcast %3 : vector<32x1xf32> to vector<32x128xf32>
    %5 = arith.addf %2, %4 : vector<32x128xf32>
    %6 = math.tanh %5 : vector<32x128xf32>
    %c0_5 = arith.constant 0 : index
    %c0_6 = arith.constant 0 : index
    %7 = vector.load %arg5[%c0_5, %c0_6] : memref<16x32xf32, #tpu.memory_space<vmem>>, vector<16x32xf32>
    %cst_7 = arith.constant dense<0.000000e+00> : vector<16x128xf32>
    %8 = tpu.matmul %7, %6, %cst_7 {dimension_numbers = #tpu.dot_dimension_numbers<[1], [0], [0], [1], [0, 0, 1, 1], [], []>} : vector<16x32xf32>, vector<32x128xf32>, vector<16x128xf32> -> vector<16x128xf32>
    %c0_8 = arith.constant 0 : index
    %c0_9 = arith.constant 0 : index
    %9 = vector.load %arg6[%c0_8, %c0_9] : memref<16x1xf32, #tpu.memory_space<vmem>>, vector<16x1xf32>
    %10 = vector.broadcast %9 : vector<16x1xf32> to vector<16x128xf32>
    %11 = arith.addf %8, %10 : vector<16x128xf32>
    %12 = math.tanh %11 : vector<16x128xf32>
    %c0_10 = arith.constant 0 : index
    %c0_11 = arith.constant 0 : index
    %13 = vector.load %arg7[%c0_10, %c0_11] : memref<5x16xf32, #tpu.memory_space<vmem>>, vector<5x16xf32>
    %cst_12 = arith.constant dense<0.000000e+00> : vector<5x128xf32>
    %14 = tpu.matmul %13, %12, %cst_12 {dimension_numbers = #tpu.dot_dimension_numbers<[1], [0], [0], [1], [0, 0, 1, 1], [], []>} : vector<5x16xf32>, vector<16x128xf32>, vector<5x128xf32> -> vector<5x128xf32>
    %c0_13 = arith.constant 0 : index
    %c0_14 = arith.constant 0 : index
    %15 = vector.load %arg8[%c0_13, %c0_14] : memref<5x1xf32, #tpu.memory_space<vmem>>, vector<5x1xf32>
    %16 = vector.broadcast %15 : vector<5x1xf32> to vector<5x128xf32>
    %17 = arith.addf %14, %16 : vector<5x128xf32>
    %18 = vector.extract_strided_slice %17 {offsets = [0, 0], sizes = [4, 128], strides = [1, 1]} : vector<5x128xf32> to vector<4x128xf32>
    %19 = vector.extract_strided_slice %17 {offsets = [4, 0], sizes = [1, 128], strides = [1, 1]} : vector<5x128xf32> to vector<1x128xf32>
    %cst_15 = arith.constant dense<0xFF800000> : vector<128xf32>
    %20 = vector.multi_reduction <maximumf>, %18, %cst_15 [0] : vector<4x128xf32> to vector<128xf32>
    %21 = vector.shape_cast %20 : vector<128xf32> to vector<1x128xf32>
    %22 = vector.broadcast %21 : vector<1x128xf32> to vector<4x128xf32>
    %23 = arith.subf %18, %22 : vector<4x128xf32>
    %24 = math.exp %23 : vector<4x128xf32>
    %cst_16 = arith.constant dense<0.000000e+00> : vector<128xf32>
    %25 = vector.multi_reduction <add>, %24, %cst_16 [0] : vector<4x128xf32> to vector<128xf32>
    %26 = vector.shape_cast %25 : vector<128xf32> to vector<1x128xf32>
    %27 = tpu.reciprocal %26 : vector<1x128xf32> -> vector<1x128xf32>
    %28 = vector.broadcast %27 : vector<1x128xf32> to vector<4x128xf32>
    %29 = arith.mulf %24, %28 : vector<4x128xf32>
    %30 = math.log %26 : vector<1x128xf32>
    %31 = vector.broadcast %30 : vector<1x128xf32> to vector<4x128xf32>
    %32 = arith.subf %23, %31 : vector<4x128xf32>
    %33 = arith.mulf %29, %23 : vector<4x128xf32>
    %cst_17 = arith.constant dense<0.000000e+00> : vector<128xf32>
    %34 = vector.multi_reduction <add>, %33, %cst_17 [0] : vector<4x128xf32> to vector<128xf32>
    %35 = vector.shape_cast %34 : vector<128xf32> to vector<1x128xf32>
    %36 = arith.subf %30, %35 : vector<1x128xf32>
    %c0_18 = arith.constant 0 : index
    %c0_19 = arith.constant 0 : index
    %37 = vector.load %arg2[%c0_18, %c0_19] : memref<1x128xi32, #tpu.memory_space<vmem>>, vector<1x128xi32>
    %38 = tpu.iota {dimensions = array<i32: 0>} : vector<4x128xi32>
    %39 = vector.broadcast %37 : vector<1x128xi32> to vector<4x128xi32>
    %40 = arith.cmpi eq, %38, %39 : vector<4x128xi32>
    %41 = arith.extui %40 : vector<4x128xi1> to vector<4x128xi32>
    %42 = arith.sitofp %41 : vector<4x128xi32> to vector<4x128xf32>
    %43 = arith.mulf %42, %32 : vector<4x128xf32>
    %cst_20 = arith.constant dense<0.000000e+00> : vector<128xf32>
    %44 = vector.multi_reduction <add>, %43, %cst_20 [0] : vector<4x128xf32> to vector<128xf32>
    %45 = vector.shape_cast %44 : vector<128xf32> to vector<1x128xf32>
    %c0_21 = arith.constant 0 : index
    %c0_22 = arith.constant 0 : index
    %46 = vector.load %arg9[%c0_21, %c0_22] : memref<7x128xf32, #tpu.memory_space<vmem>>, vector<4x128xf32>
    tpu.vector_store %arg9[%c0_21, %c0_22], %29 {strides = array<i32>} : memref<7x128xf32, #tpu.memory_space<vmem>>, vector<4x128xf32>,
    %c4 = arith.constant 4 : index
    %c0_23 = arith.constant 0 : index
    %47 = vector.load %arg9[%c4, %c0_23] : memref<7x128xf32, #tpu.memory_space<vmem>>, vector<1x128xf32>
    tpu.vector_store %arg9[%c4, %c0_23], %45 {strides = array<i32>} : memref<7x128xf32, #tpu.memory_space<vmem>>, vector<1x128xf32>,
    %c5 = arith.constant 5 : index
    %c0_24 = arith.constant 0 : index
    %48 = vector.load %arg9[%c5, %c0_24] : memref<7x128xf32, #tpu.memory_space<vmem>>, vector<1x128xf32>
    tpu.vector_store %arg9[%c5, %c0_24], %19 {strides = array<i32>} : memref<7x128xf32, #tpu.memory_space<vmem>>, vector<1x128xf32>,
    %c6 = arith.constant 6 : index
    %c0_25 = arith.constant 0 : index
    %49 = vector.load %arg9[%c6, %c0_25] : memref<7x128xf32, #tpu.memory_space<vmem>>, vector<1x128xf32>
    tpu.vector_store %arg9[%c6, %c0_25], %36 {strides = array<i32>} : memref<7x128xf32, #tpu.memory_space<vmem>>, vector<1x128xf32>,
    return
  }
  func.func @transform_0(%arg0: i32) -> (i32, i32) {
    %c0_i32 = arith.constant 0 : i32
    %c0_i32_0 = arith.constant 0 : i32
    return %c0_i32, %arg0 : i32, i32
  }
  func.func @transform_1(%arg0: i32) -> (i32, i32) {
    %c0_i32 = arith.constant 0 : i32
    %c0_i32_0 = arith.constant 0 : i32
    return %c0_i32, %arg0 : i32, i32
  }
  func.func @transform_2(%arg0: i32) -> (i32, i32) {
    %c0_i32 = arith.constant 0 : i32
    %c0_i32_0 = arith.constant 0 : i32
    %c0_i32_1 = arith.constant 0 : i32
    return %c0_i32, %c0_i32_0 : i32, i32
  }
  func.func @transform_3(%arg0: i32) -> (i32, i32) {
    %c0_i32 = arith.constant 0 : i32
    %c0_i32_0 = arith.constant 0 : i32
    %c0_i32_1 = arith.constant 0 : i32
    return %c0_i32, %c0_i32_0 : i32, i32
  }
  func.func @transform_4(%arg0: i32) -> (i32, i32) {
    %c0_i32 = arith.constant 0 : i32
    %c0_i32_0 = arith.constant 0 : i32
    %c0_i32_1 = arith.constant 0 : i32
    return %c0_i32, %c0_i32_0 : i32, i32
  }
  func.func @transform_5(%arg0: i32) -> (i32, i32) {
    %c0_i32 = arith.constant 0 : i32
    %c0_i32_0 = arith.constant 0 : i32
    %c0_i32_1 = arith.constant 0 : i32
    return %c0_i32, %c0_i32_0 : i32, i32
  }
  func.func @transform_6(%arg0: i32) -> (i32, i32) {
    %c0_i32 = arith.constant 0 : i32
    %c0_i32_0 = arith.constant 0 : i32
    %c0_i32_1 = arith.constant 0 : i32
    return %c0_i32, %c0_i32_0 : i32, i32
  }
  func.func @transform_7(%arg0: i32) -> (i32, i32) {
    %c0_i32 = arith.constant 0 : i32
    %c0_i32_0 = arith.constant 0 : i32
    %c0_i32_1 = arith.constant 0 : i32
    return %c0_i32, %c0_i32_0 : i32, i32
  }
  func.func @transform_8(%arg0: i32) -> (i32, i32) {
    %c0_i32 = arith.constant 0 : i32
    %c0_i32_0 = arith.constant 0 : i32
    return %c0_i32, %arg0 : i32, i32
  }
}

</mosaic_0001>

<llo_original>
// kernel: tpu_custom_call.1
$region0: #{tpu_custom_call.1}
  #allocation0 [shape = 'u32[]', space=smem, size = 0x4, offset = 0x4, fixed_abs, tag = 'smem constant byte address 0x4 - core index']
  #allocation1 [shape = 'u32[72,128]{1,0:T(1,128)}', space=vmem, size = 0x9000, scoped, tag = 'internal scratch']
  %s0 = inlined_call_operand.vmem [shape: f32[12,128], index: 0, kind: input, shape index: {}]
  %s1 = inlined_call_operand.vmem [shape: s32[1,128], index: 1, kind: input, shape index: {}]
  %s2 = inlined_call_operand.vmem [shape: f32[32,12], index: 2, kind: input, shape index: {}]
  %s3 = inlined_call_operand.vmem [shape: f32[32,1], index: 3, kind: input, shape index: {}]
  %s4 = inlined_call_operand.vmem [shape: f32[16,32], index: 4, kind: input, shape index: {}]
  %s5 = inlined_call_operand.vmem [shape: f32[16,1], index: 5, kind: input, shape index: {}]
  %s6 = inlined_call_operand.vmem [shape: f32[5,16], index: 6, kind: input, shape index: {}]
  %s7 = inlined_call_operand.vmem [shape: f32[5,1], index: 7, kind: input, shape index: {}]
  %s8 = inlined_call_operand.hbm [shape: f32[7,128], index: 8, kind: output, shape index: {}]
  %s9 = sld [smem:[#allocation0]]
  $region42: #{tpu_custom_call.1} parent=0
    _
  %s11 = ssub.s32 1, %s9
  %s12 = scalar_select 0, %s11, %s9
  $region1: #{tpu_custom_call.1} parent=0
    #allocation2 [shape = 'u8[4096]{0}', space=vmem, size = 0x1000, scoped, tag = 'output window, operand 0, single buffered']
    #allocation3 [shape = 's32[1]{0}', space=sflag, size = 0x4, scoped, tag = 'scoped memory for tpu_custom_call.1']
    %13 = vsyncpa [#allocation3], 0
    // Predicated region
    $region2: #{tpu_custom_call.1} parent=1 // pred_check
      _
    $region3: #{tpu_custom_call.1} parent=1 // pred_check_branch
      %15 = sbr.rel (0) target = $region5
    $region4: #{tpu_custom_call.1} parent=1 // pred_region
      _
    $region5: #{tpu_custom_call.1} parent=1 // pred_fallthru
      _
    // Predicated region
    $region6: #{tpu_custom_call.1} parent=1 // pred_check
      _
    $region7: #{tpu_custom_call.1} parent=1 // pred_check_branch
      %17 = sbr.rel (0) target = $region9
    $region8: #{tpu_custom_call.1} parent=1 // pred_region
      _
    $region9: #{tpu_custom_call.1} parent=1 // pred_fallthru
      _
    // Predicated region
    $region10: #{tpu_custom_call.1} parent=1 // pred_check
      _
    $region11: #{tpu_custom_call.1} parent=1 // pred_check_branch
      %19 = sbr.rel (0) target = $region13
    $region12: #{tpu_custom_call.1} parent=1 // pred_region
      _
    $region13: #{tpu_custom_call.1} parent=1 // pred_fallthru
      _
    // Predicated region
    $region14: #{tpu_custom_call.1} parent=1 // pred_check
      _
    $region15: #{tpu_custom_call.1} parent=1 // pred_check_branch
      %21 = sbr.rel (0) target = $region17
    $region16: #{tpu_custom_call.1} parent=1 // pred_region
      _
    $region17: #{tpu_custom_call.1} parent=1 // pred_fallthru
      _
    // Predicated region
    $region18: #{tpu_custom_call.1} parent=1 // pred_check
      _
    $region19: #{tpu_custom_call.1} parent=1 // pred_check_branch
      %23 = sbr.rel (0) target = $region21
    $region20: #{tpu_custom_call.1} parent=1 // pred_region
      _
    $region21: #{tpu_custom_call.1} parent=1 // pred_fallthru
      _
    // Predicated region
    $region22: #{tpu_custom_call.1} parent=1 // pred_check
      _
    $region23: #{tpu_custom_call.1} parent=1 // pred_check_branch
      %25 = sbr.rel (0) target = $region25
    $region24: #{tpu_custom_call.1} parent=1 // pred_region
      _
    $region25: #{tpu_custom_call.1} parent=1 // pred_fallthru
      _
    // Predicated region
    $region26: #{tpu_custom_call.1} parent=1 // pred_check
      _
    $region27: #{tpu_custom_call.1} parent=1 // pred_check_branch
      %27 = sbr.rel (0) target = $region29
    $region28: #{tpu_custom_call.1} parent=1 // pred_region
      _
    $region29: #{tpu_custom_call.1} parent=1 // pred_fallthru
      _
    // Predicated region
    $region30: #{tpu_custom_call.1} parent=1 // pred_check
      _
    $region31: #{tpu_custom_call.1} parent=1 // pred_check_branch
      %29 = sbr.rel (0) target = $region33
    $region32: #{tpu_custom_call.1} parent=1 // pred_region
      _
    $region33: #{tpu_custom_call.1} parent=1 // pred_fallthru
      _
    %v30 = vld [vmem:[%s0] sm:$0xff]
    %v31 = vld [vmem:[%s0 + $0x8] sm:$0xf]
    %v32 = vld [vmem:[%s2] sm:$0xff]
    %v33 = vld [vmem:[%s2 + $0x8] sm:$0xff]
    %v34 = vld [vmem:[%s2 + $0x10] sm:$0xff]
    %v35 = vld [vmem:[%s2 + $0x18] sm:$0xff]
    %v36 = vld [vmem:[%s3] sm:$0xff]
    %v37 = vld [vmem:[%s3 + $0x8] sm:$0xff]
    %v38 = vld [vmem:[%s3 + $0x10] sm:$0xff]
    %v39 = vld [vmem:[%s3 + $0x18] sm:$0xff]
    %41 = vset.pattern.permute.xlu0 0
    %42 = vperm.xlu0 %41, %v36
    %v43 = vpop.permute.xlu0 %42
    %46 = vset.pattern.permute.xlu0 0
    %47 = vperm.xlu0 %46, %v37
    %v48 = vpop.permute.xlu0 %47
    %51 = vset.pattern.permute.xlu0 0
    %52 = vperm.xlu0 %51, %v38
    %v53 = vpop.permute.xlu0 %52
    %56 = vset.pattern.permute.xlu0 0
    %57 = vperm.xlu0 %56, %v39
    %v58 = vpop.permute.xlu0 %57
    %vm60 = vcmask 97280
    %v62 = vsel %vm60, %v32, 0
    %v65 = vsel %vm60, %v33, 0
    %v68 = vsel %vm60, %v34, 0
    %v71 = vsel %vm60, %v35, 0
    %vm73 = vcmask 1043456
    %v75 = vsel %vm73, %v31, 0
    %77 = vmatpush.msra.mxu0 0.0
    %78 = vmatpush.msra.mxu0 0.0
    %79 = vmatpush.msra.mxu0 0.0
    %80 = vmatpush.msra.mxu0 0.0
    %81 = vmatpush.msra.mxu0 0.0
    %82 = vmatpush.msra.mxu0 0.0
    %83 = vmatpush.msra.mxu0 0.0
    %84 = vmatpush.msra.mxu0 0.0
    %85 = vmatpush.msra.mxu0 0.0
    %86 = vmatpush.msra.mxu0 0.0
    %87 = vmatpush.msra.mxu0 0.0
    %88 = vmatpush.msra.mxu0 0.0
    %89 = vmatpush.msra.mxu0 0.0
    %90 = vmatpush.msra.mxu0 0.0
    %91 = vmatpush.msra.mxu0 %v75
    %92 = vmatpush.msra.mxu0 %v30
    %93 = vmatmul.f32.gmra.mxu0 %v62
    %v94 = vpop.f32.mrf.mxu0
    %v95 = vadd.f32 %v43, %v94
    %96 = vmatmul.f32.gmra.mxu0 %v65
    %v97 = vpop.f32.mrf.mxu0
    %v98 = vadd.f32 %v48, %v97
    %99 = vmatmul.f32.gmra.mxu0 %v68
    %v100 = vpop.f32.mrf.mxu0
    %v101 = vadd.f32 %v53, %v100
    %102 = vmatmul.f32.gmra.mxu0 %v71
    %v103 = vpop.f32.mrf.mxu0
    %v104 = vadd.f32 %v58, %v103
    %105 = vdwg.mxu0
    %v106 = vtanh.pop %v95
    %v107 = vtanh.pop %v98
    %v108 = vtanh.pop %v101
    %v109 = vtanh.pop %v104
    %v110 = vld [vmem:[%s4] sm:$0xff]
    %v111 = vld [vmem:[%s4 + $0x8] sm:$0xff]
    %v112 = vld [vmem:[%s5] sm:$0xff]
    %v113 = vld [vmem:[%s5 + $0x8] sm:$0xff]
    %115 = vset.pattern.permute.xlu0 0
    %116 = vperm.xlu0 %115, %v112
    %v117 = vpop.permute.xlu0 %116
    %120 = vset.pattern.permute.xlu0 0
    %121 = vperm.xlu0 %120, %v113
    %v122 = vpop.permute.xlu0 %121
    %vm124 = vcmask 261120
    %v126 = vsel %vm124, %v110, 0
    %v129 = vsel %vm124, %v111, 0
    %131 = vmatpush.msra.mxu0 0.0
    %132 = vmatpush.msra.mxu0 0.0
    %133 = vmatpush.msra.mxu0 0.0
    %134 = vmatpush.msra.mxu0 0.0
    %135 = vmatpush.msra.mxu0 0.0
    %136 = vmatpush.msra.mxu0 0.0
    %137 = vmatpush.msra.mxu0 0.0
    %138 = vmatpush.msra.mxu0 0.0
    %139 = vmatpush.msra.mxu0 0.0
    %140 = vmatpush.msra.mxu0 0.0
    %141 = vmatpush.msra.mxu0 0.0
    %142 = vmatpush.msra.mxu0 0.0
    %143 = vmatpush.msra.mxu0 %v109
    %144 = vmatpush.msra.mxu0 %v108
    %145 = vmatpush.msra.mxu0 %v107
    %146 = vmatpush.msra.mxu0 %v106
    %147 = vmatmul.f32.gmra.mxu0 %v126
    %v148 = vpop.f32.mrf.mxu0
    %v149 = vadd.f32 %v117, %v148
    %150 = vmatmul.f32.gmra.mxu0 %v129
    %v151 = vpop.f32.mrf.mxu0
    %v152 = vadd.f32 %v122, %v151
    %153 = vdwg.mxu0
    %v154 = vtanh.pop %v149
    %v155 = vtanh.pop %v152
    %v156 = vld [vmem:[%s6] sm:$0x1f]
    %v157 = vld [vmem:[%s7] sm:$0x1f]
    %159 = vset.pattern.permute.xlu0 0
    %160 = vperm.xlu0 %159, %v157
    %v161 = vpop.permute.xlu0 %160
    %vm163 = vcmask 130048
    %v165 = vsel %vm163, %v156, 0
    %167 = vmatpush.msra.mxu0 0.0
    %168 = vmatpush.msra.mxu0 0.0
    %169 = vmatpush.msra.mxu0 0.0
    %170 = vmatpush.msra.mxu0 0.0
    %171 = vmatpush.msra.mxu0 0.0
    %172 = vmatpush.msra.mxu0 0.0
    %173 = vmatpush.msra.mxu0 0.0
    %174 = vmatpush.msra.mxu0 0.0
    %175 = vmatpush.msra.mxu0 0.0
    %176 = vmatpush.msra.mxu0 0.0
    %177 = vmatpush.msra.mxu0 0.0
    %178 = vmatpush.msra.mxu0 0.0
    %179 = vmatpush.msra.mxu0 0.0
    %180 = vmatpush.msra.mxu0 0.0
    %181 = vmatpush.msra.mxu0 %v155
    %182 = vmatpush.msra.mxu0 %v154
    %183 = vmatmul.f32.gmra.mxu0 %v165
    %v184 = vpop.f32.mrf.mxu0
    %v185 = vadd.f32 %v161, %v184
    %186 = vdwg.mxu0
    %v187 = vsel %vm73, %v185, -inf
    %v188 = vrot.slane %v187, 4
    %v189 = vmax.f32 %v187, %v188
    %v190 = vrot.slane %v189, 2
    %v191 = vmax.f32 %v189, %v190
    %v192 = vrot.slane %v191, 1
    %v193 = vmax.f32 %v191, %v192
    %v194 = vsub.f32 %v185, %v193
    %v195 = vmul.f32 %v194, 1.442695
    %v196 = vpow.pop %v195
    %v197 = vsel %vm73, %v196, 0.0
    %v198 = vrot.slane %v197, 4
    %v199 = vadd.f32 %v197, %v198
    %v200 = vrot.slane %v199, 2
    %v201 = vadd.f32 %v199, %v200
    %v202 = vrot.slane %v201, 1
    %v203 = vadd.f32 %v201, %v202
    %v204 = vrcp.pop %v203
    %v205 = vmul.f32 %v203, %v204
    %v206 = vsub.f32 1.0, %v205
    %v207 = vmul.f32 %v204, %v206
    %v208 = vadd.f32 %v204, %v207
    %vm209 = vweird.f32 %v203
    %vm210 = vweird.f32 %v204
    %vm211 = vmor %vm209, %vm210
    %v212 = vsel %vm211, %v204, %v208
    %v213 = vand.u32 2147483647, %v203
    %vm214 = vcmp.eq.f32.partialorder %v213, 8.507059e+37
    %v215 = vand.u32 %v203, 2147483648
    %v216 = vor.u32 1.1754944e-38, %v215
    %v217 = vsel %vm214, %v216, %v212
    %v218 = vmul.f32 %v196, %v217
    %v219 = vlog2.pop %v203
    %v220 = vmul.f32 %v219, 0.6931472
    %v221 = vsub.f32 %v194, %v220
    %v222 = vmul.f32 %v218, %v194
    %v223 = vsel %vm73, %v222, 0.0
    %v224 = vrot.slane %v223, 4
    %v225 = vadd.f32 %v223, %v224
    %v226 = vrot.slane %v225, 2
    %v227 = vadd.f32 %v225, %v226
    %v228 = vrot.slane %v227, 1
    %v229 = vadd.f32 %v227, %v228
    %v230 = vsub.f32 %v220, %v229
    %v231 = vld [vmem:[%s1] sm:$0x1]
    %v232 = vlaneseq
    %v233 = vshrl.u32 %v232, 7
    %v234 = vperm.slane %v231, 0
    %vm235 = vcmp.eq.s32.totalorder %v233, %v234
    %v236 = vsel %vm235, 1, 0
    %v237 = vcvt.s32.f32 %v236
    %v238 = vmul.f32 %v237, %v221
    %v239 = vsel %vm73, %v238, 0.0
    %v240 = vrot.slane %v239, 4
    %v241 = vadd.f32 %v239, %v240
    %v242 = vrot.slane %v241, 2
    %v243 = vadd.f32 %v241, %v242
    %v244 = vrot.slane %v243, 1
    %v245 = vadd.f32 %v243, %v244
    %246 = vst [vmem:[#allocation2] sm:$0xf] %v218
    %247 = vst [vmem:[#allocation2 + $0x4] sm:$0x1] %v245
    %248 = vst [vmem:[#allocation2 + $0x1] sm:$0x10] %v185
    %249 = vst [vmem:[#allocation2 + $0x6] sm:$0x1] %v230
    // Predicated region
    $region34: #{tpu_custom_call.1} parent=1 // pred_check
      _
    $region35: #{tpu_custom_call.1} parent=1 // pred_check_branch
      %251 = sbr.rel (0) target = $region37
    $region36: #{tpu_custom_call.1} parent=1 // pred_region
      %253 = vsyncadd [#allocation3], 0
      %s255 = sshll.u32 [#allocation2], 4
      %s256 = int_to_ptr.vmem [resolvable:$true] %s255
      %s257 = sshll.u32 %s8, 4
      %s258 = int_to_ptr.hbm [resolvable:$true] %s257
      %260 = dma.vmem_to_hbm [thread:$0]  %s256, 128, %s258, [#allocation3]
    $region37: #{tpu_custom_call.1} parent=1 // pred_fallthru
      _
    // Predicated region
    $region38: #{tpu_custom_call.1} parent=1 // pred_check
      _
    $region39: #{tpu_custom_call.1} parent=1 // pred_check_branch
      %262 = sbr.rel (0) target = $region41
    $region40: #{tpu_custom_call.1} parent=1 // pred_region
      %264 = dma.done [#allocation3], 128
    $region41: #{tpu_custom_call.1} parent=1 // pred_fallthru
      _
    %265 = vsyncpa [#allocation3], 1

</llo_original>
